<compile_context>
chip_gen: v5e
topology: v5e:2x2
jax: 0.10.0
libtpu: 0.0.40
codegen_flags: <defaults>
</compile_context>

<pallas_src>
import functools

import jax
import jax.numpy as jnp
from jax.experimental import pallas as pl
from jax.experimental.pallas import tpu as pltpu

_LANE = 128


def _round_up(n: int, m: int) -> int:
    return ((n + m - 1) // m) * m


def _largest_aligned_divisor(n: int, cap: int) -> int:
    """Largest multiple of 128 that divides `n` (n a 128-multiple) and is <= cap."""
    cap = max(_LANE, min(cap, n))
    best = _LANE
    d = _LANE
    while d <= cap:
        if n % d == 0:
            best = d
        d += _LANE
    return best


def _vmem_capacity_bytes() -> int:
    try:
        info = pltpu.get_tpu_info()
        return int(getattr(info, "vmem_capacity_bytes", 64 << 20))
    except Exception:
        return 64 << 20  # conservative (v7x-sized) fallback


def _slr_kernel(r_ref, x_ref, wt_ref, b_ref, o_ref, ssq_ref, *,
                use_bias: bool, x_resident: bool, block_k: int):
    k = pl.program_id(1)

    @pl.when(k == 0)
    def _init():
        o_ref[...] = jnp.zeros_like(o_ref)
        ssq_ref[...] = jnp.zeros_like(ssq_ref)

    if x_resident:
        # x is one resident (B, In_p) block; slice the current K chunk in-VMEM.
        x = x_ref[:, pl.ds(pl.multiple_of(k * block_k, _LANE), block_k)]
    else:
        x = x_ref[...]
    wt = wt_ref[...]                                    # (tk, to), param dtype

    # Partial matmul on the MXU, f32 accumulation directly into the resident
    # output tile (its block index is constant across the K axis).
    o_ref[...] += jnp.dot(x, wt, preferred_element_type=jnp.float32)

    # Partial sum-of-squares of each weight row (= column of w^T): (1, to).
    wt32 = wt.astype(jnp.float32)
    ssq_ref[...] += jnp.sum(wt32 * wt32, axis=0, keepdims=True)

    @pl.when(k == pl.num_programs(1) - 1)
    def _epilogue():
        # F.normalize: divide by max(norm, 1e-12)  ==  * rsqrt(max(ssq, 1e-24)).
        inv_norm = jax.lax.rsqrt(jnp.maximum(ssq_ref[...], 1e-24))   # (1, to)
        out = o_ref[...] * inv_norm
        if use_bias:
            out = out + r_ref[0, 0] * jnp.tanh(b_ref[...].astype(jnp.float32))
        o_ref[...] = out


def prepare_slr_params(weight, bias, *, param_dtype=jnp.float32):
    """One-time (init-time) parameter prep.

    Transposes the weight to (In, Out) (natural MXU orientation) and pads both
    weight and bias to lane-dense 128-multiples.  This is the only place the
    weight is copied in HBM; the forward path then streams it exactly once.
    """
    out_features, in_features = weight.shape
    in_p = _round_up(in_features, _LANE)
    out_p = _round_up(out_features, _LANE)
    wt_p = jnp.pad(weight.astype(param_dtype).T,
                   ((0, in_p - in_features), (0, out_p - out_features)))
    b_p = jnp.pad(bias.astype(param_dtype).reshape(1, -1),
                  ((0, 0), (0, out_p - out_features)))
    return wt_p, b_p


def slr_layer_apply(x, wt_p, b_p, out_features, *, bias_bool: bool = True,
                    max_block_out: int = 2048, max_block_k: int | None = None):
    """Hot-path forward.  `wt_p`, `b_p` come from `prepare_slr_params`."""
    B, in_features = x.shape
    in_p, out_p = wt_p.shape
    assert in_features <= in_p and out_features <= out_p
    param_dtype = wt_p.dtype
    p_size = jnp.dtype(param_dtype).itemsize

    # r = ||x[0]||_2, computed once in f32 (tiny reduce; .detach() is a no-op
    # in the forward), passed as a (1,1) SMEM scalar — tiling-independent.
    x32 = x.astype(jnp.float32)
    r = jnp.sqrt(jnp.sum(x32[0] * x32[0])).reshape(1, 1)

    x_p = jnp.pad(x.astype(param_dtype), ((0, 0), (0, in_p - in_features)))

    # ---- generation-aware tiling --------------------------------------------
    vmem_cap = _vmem_capacity_bytes()
    wt_budget = min(8 << 20, vmem_cap // 12)       # target bytes per weight tile

    # Out tile: keep >= 2 tiles when possible (megacore sharding on v7x).
    to_cap = min(out_p // 2, max_block_out) if out_p >= 2 * _LANE else out_p
    to = _largest_aligned_divisor(out_p, to_cap)

    # K tile: as big as the weight-tile budget allows (tk == in_p removes the
    # K loop and the init/epilogue branches entirely).
    tk_cap = max(_LANE, wt_budget // (to * p_size))
    if max_block_k is not None:
        tk_cap = min(tk_cap, max_block_k)
    tk = _largest_aligned_divisor(in_p, tk_cap)

    # Keep x resident across Out tiles when it is small (avoids re-streaming
    # x once per out tile).
    x_resident = (B * in_p * p_size) <= min(16 << 20, vmem_cap // 16)

    grid = (out_p // to, in_p // tk)

    # ---- VMEM estimate / generation-aware limit ------------------------------
    est = (2 * tk * to * p_size            # weight tiles (double-buffered)
           + 2 * to * p_size               # bias tile
           + 2 * B * to * 4                # resident f32 output tile
           + to * 4)                       # ssq scratch
    est += (2 * B * in_p if x_resident else 2 * B * tk) * p_size
    vmem_limit = int(min(max(2 * est + (4 << 20), 32 << 20),
                         max(int(0.6 * vmem_cap), est + (4 << 20))))

    cost = pl.CostEstimate(
        flops=2 * B * in_p * out_p,
        transcendentals=out_p if bias_bool else 0,
        bytes_accessed=(B * in_p + in_p * out_p + out_p) * p_size + B * out_p * 4,
    )

    if x_resident:
        x_spec = pl.BlockSpec((B, in_p), lambda j, k: (0, 0))
    else:
        x_spec = pl.BlockSpec((B, tk), lambda j, k: (0, k))

    kernel = functools.partial(_slr_kernel, use_bias=bias_bool,
                               x_resident=x_resident, block_k=tk)

    out_padded = pl.pallas_call(
        kernel,
        out_shape=jax.ShapeDtypeStruct((B, out_p), jnp.float32),
        grid_spec=pltpu.PrefetchScalarGridSpec(
            num_scalar_prefetch=0,
            grid=grid,
            in_specs=[
                pl.BlockSpec(memory_space=pltpu.MemorySpace.SMEM),   # r (1,1)
                x_spec,                                              # x
                pl.BlockSpec((tk, to), lambda j, k: (k, j)),         # w^T tile
                pl.BlockSpec((1, to), lambda j, k: (0, j)),          # bias tile
            ],
            out_specs=pl.BlockSpec((B, to), lambda j, k: (0, j)),
            scratch_shapes=[
                pltpu.VMEM((1, to), jnp.float32),   # weight-row sum-of-squares
            ],
        ),
        compiler_params=pltpu.CompilerParams(
            dimension_semantics=("parallel", "arbitrary"),
            vmem_limit_bytes=vmem_limit,
        ),
        cost_estimate=cost,
    )(r, x_p, wt_p, b_p)

    return out_padded[:, :out_features]


def slr_layer(x, weight, bias, *, bias_bool: bool = True,
              param_dtype=jnp.float32, **kw):
    """Convenience: prepare + apply in one call.  Prefer calling
    prepare_slr_params once at init and slr_layer_apply in the hot path."""
    wt_p, b_p = prepare_slr_params(weight, bias, param_dtype=param_dtype)
    return slr_layer_apply(x, wt_p, b_p, weight.shape[0],
                           bias_bool=bias_bool, **kw)


def slr_layer_ref(x, weight, bias, *, bias_bool: bool = True):
    """Pure-JAX reference mirroring the PyTorch module."""
    w_hat = weight / jnp.maximum(
        jnp.linalg.norm(weight, axis=1, keepdims=True), 1e-12)
    cosine = x @ w_hat.T
    if bias_bool:
        r = jnp.linalg.norm(x[0])
        cosine = cosine + r * jnp.tanh(bias)[None, :]
    return cosine


if __name__ == "__main__":
    key = jax.random.PRNGKey(0)
    kx, kw, kb, kx2, kw2, kx3, kw3, kb3 = jax.random.split(key, 8)

    # Case 1: module demo shapes (B=8, in=32, out=16), kaiming-scale weight,
    # zero bias (as in __init__).  Single-tile grid.
    B, in_f, out_f = 8, 32, 16
    x = jax.random.normal(kx, (B, in_f), dtype=jnp.float32)
    w = jnp.sqrt(2.0 / in_f) * jax.random.normal(kw, (out_f, in_f), jnp.float32)
    b = jnp.zeros((out_f,), jnp.float32)

    wt_p, b_p = prepare_slr_params(w, b)                       # init-time prep
    out1 = jax.block_until_ready(slr_layer_apply(x, wt_p, b_p, out_f))
    ref1 = slr_layer_ref(x, w, b)
    assert out1.shape == (B, out_f)
    assert jnp.allclose(out1, ref1, atol=1e-4, rtol=1e-5), "case 1 mismatch"

    # Case 2: ragged shapes (in=640, out=272 -> 384 padded), nonzero bias,
    # multiple Out tiles, single K step (tk == in_p), plus bias_bool=False.
    B2, in2, out2 = 8, 640, 272
    x2 = jax.random.normal(kx2, (B2, in2), jnp.float32)
    w2 = jnp.sqrt(2.0 / in2) * jax.random.normal(kw2, (out2, in2), jnp.float32)
    b2 = 0.5 * jax.random.normal(kb, (out2,), jnp.float32)

    wt2_p, b2_p = prepare_slr_params(w2, b2)
    out2_b = jax.block_until_ready(slr_layer_apply(x2, wt2_p, b2_p, out2))
    ref2_b = slr_layer_ref(x2, w2, b2)
    assert out2_b.shape == (B2, out2)
    assert jnp.allclose(out2_b, ref2_b, atol=2e-4, rtol=1e-4), "case 2 mismatch"

    out2_nb = jax.block_until_ready(
        slr_layer_apply(x2, wt2_p, b2_p, out2, bias_bool=False))
    ref2_nb = slr_layer_ref(x2, w2, b2, bias_bool=False)
    assert jnp.allclose(out2_nb, ref2_nb, atol=2e-4, rtol=1e-4), "case 3 mismatch"

    # Case 3: force a multi-step K reduction (max_block_k=256 -> 4 K tiles)
    # with 2 Out tiles, exercising init/accumulate/epilogue and in-kernel
    # slicing of the resident x block.
    B3, in3, out3 = 8, 1024, 256
    x3 = jax.random.normal(kx3, (B3, in3), jnp.float32)
    w3 = jnp.sqrt(2.0 / in3) * jax.random.normal(kw3, (out3, in3), jnp.float32)
    b3 = 0.3 * jax.random.normal(kb3, (out3,), jnp.float32)
    wt3_p, b3_p = prepare_slr_params(w3, b3)
    out3_k = jax.block_until_ready(
        slr_layer_apply(x3, wt3_p, b3_p, out3, max_block_k=256))
    ref3 = slr_layer_ref(x3, w3, b3)
    assert jnp.allclose(out3_k, ref3, atol=5e-4, rtol=5e-4), "case 4 mismatch"

    # Case 4: optional bf16 parameter streaming (one-time cast at prep time),
    # f32 accumulation in-kernel; looser tolerance vs the f32 reference.
    wt3_bf, b3_bf = prepare_slr_params(w3, b3, param_dtype=jnp.bfloat16)
    out3_bf = jax.block_until_ready(slr_layer_apply(x3, wt3_bf, b3_bf, out3))
    assert jnp.allclose(out3_bf, ref3, atol=3e-2, rtol=3e-2), "case 5 mismatch"

    print("KERNEL_OK")
</pallas_src>

<mosaic_0001>
module attributes {stable_mosaic.version = 11 : i64} {
  func.func @_slr_kernel(%arg0: i32, %arg1: i32, %arg2: memref<1x1xf32, #tpu.memory_space<smem>>, %arg3: memref<8x128xf32, #tpu.memory_space<vmem>>, %arg4: memref<128x128xf32, #tpu.memory_space<vmem>>, %arg5: memref<1x128xf32, #tpu.memory_space<vmem>>, %arg6: memref<8x128xf32, #tpu.memory_space<vmem>>, %arg7: memref<1x128xf32, #tpu.memory_space<vmem>>) attributes {dimension_semantics = [#tpu.dimension_semantics<parallel>, #tpu.dimension_semantics<arbitrary>], iteration_bounds = array<i64: 1, 1>, scalar_prefetch = 0 : i64, scratch_operands = 1 : i64, tpu.core_type = #tpu.core_type<tc>, window_params = [{transform_indices = @transform_0, window_bounds = array<i64: 1, 1>}, {pipeline_mode = #tpu.pipeline_mode<synchronous>, transform_indices = @transform_1, window_bounds = array<i64: 8, 128>}, {transform_indices = @transform_2, window_bounds = array<i64: 128, 128>}, {transform_indices = @transform_3, window_bounds = array<i64: 1, 128>}, {transform_indices = @transform_4, window_bounds = array<i64: 8, 128>}]} {
    %c0_i32 = arith.constant 0 : i32
    %0 = arith.cmpi eq, %arg1, %c0_i32 : i32
    %1 = arith.extui %0 : i1 to i32
    %c0_i32_0 = arith.constant 0 : i32
    %2 = arith.cmpi ne, %1, %c0_i32_0 : i32
    scf.if %2 {
      %cst_14 = arith.constant 0.000000e+00 : f32
      %21 = vector.broadcast %cst_14 : f32 to vector<8x128xf32>
      %c0_15 = arith.constant 0 : index
      %c0_16 = arith.constant 0 : index
      %22 = vector.load %arg6[%c0_15, %c0_16] : memref<8x128xf32, #tpu.memory_space<vmem>>, vector<8x128xf32>
      tpu.vector_store %arg6[%c0_15, %c0_16], %21 {strides = array<i32>} : memref<8x128xf32, #tpu.memory_space<vmem>>, vector<8x128xf32>,
      %cst_17 = arith.constant 0.000000e+00 : f32
      %23 = vector.broadcast %cst_17 : f32 to vector<1x128xf32>
      %c0_18 = arith.constant 0 : index
      %c0_19 = arith.constant 0 : index
      %24 = vector.load %arg7[%c0_18, %c0_19] : memref<1x128xf32, #tpu.memory_space<vmem>>, vector<1x128xf32>
      tpu.vector_store %arg7[%c0_18, %c0_19], %23 {strides = array<i32>} : memref<1x128xf32, #tpu.memory_space<vmem>>, vector<1x128xf32>,
    } else {
    }
    %c128_i32 = arith.constant 128 : i32
    %3 = arith.muli %arg1, %c128_i32 : i32
    %4 = tpu.assume_multiple %3, 128 : i32
    %c0 = arith.constant 0 : index
    %5 = arith.index_cast %4 : i32 to index
    %6 = vector.load %arg3[%c0, %5] : memref<8x128xf32, #tpu.memory_space<vmem>>, vector<8x128xf32>
    %c0_1 = arith.constant 0 : index
    %c0_2 = arith.constant 0 : index
    %7 = vector.load %arg4[%c0_1, %c0_2] : memref<128x128xf32, #tpu.memory_space<vmem>>, vector<128x128xf32>
    %c0_3 = arith.constant 0 : index
    %c0_4 = arith.constant 0 : index
    %8 = vector.load %arg6[%c0_3, %c0_4] : memref<8x128xf32, #tpu.memory_space<vmem>>, vector<8x128xf32>
    %cst = arith.constant dense<0.000000e+00> : vector<8x128xf32>
    %9 = tpu.matmul %6, %7, %cst {dimension_numbers = #tpu.dot_dimension_numbers<[1], [0], [0], [1], [0, 0, 1, 1], [], []>} : vector<8x128xf32>, vector<128x128xf32>, vector<8x128xf32> -> vector<8x128xf32>
    %10 = arith.addf %8, %9 : vector<8x128xf32>
    %c0_5 = arith.constant 0 : index
    %c0_6 = arith.constant 0 : index
    %11 = vector.load %arg6[%c0_5, %c0_6] : memref<8x128xf32, #tpu.memory_space<vmem>>, vector<8x128xf32>
    tpu.vector_store %arg6[%c0_5, %c0_6], %10 {strides = array<i32>} : memref<8x128xf32, #tpu.memory_space<vmem>>, vector<8x128xf32>,
    %c0_7 = arith.constant 0 : index
    %c0_8 = arith.constant 0 : index
    %12 = vector.load %arg7[%c0_7, %c0_8] : memref<1x128xf32, #tpu.memory_space<vmem>>, vector<1x128xf32>
    %13 = arith.mulf %7, %7 : vector<128x128xf32>
    %cst_9 = arith.constant dense<0.000000e+00> : vector<128xf32>
    %14 = vector.multi_reduction <add>, %13, %cst_9 [0] : vector<128x128xf32> to vector<128xf32>
    %15 = vector.shape_cast %14 : vector<128xf32> to vector<1x128xf32>
    %16 = arith.addf %12, %15 : vector<1x128xf32>
    %c0_10 = arith.constant 0 : index
    %c0_11 = arith.constant 0 : index
    %17 = vector.load %arg7[%c0_10, %c0_11] : memref<1x128xf32, #tpu.memory_space<vmem>>, vector<1x128xf32>
    tpu.vector_store %arg7[%c0_10, %c0_11], %16 {strides = array<i32>} : memref<1x128xf32, #tpu.memory_space<vmem>>, vector<1x128xf32>,
    %c0_i32_12 = arith.constant 0 : i32
    %18 = arith.cmpi eq, %arg1, %c0_i32_12 : i32
    %19 = arith.extui %18 : i1 to i32
    %c0_i32_13 = arith.constant 0 : i32
    %20 = arith.cmpi ne, %19, %c0_i32_13 : i32
    scf.if %20 {
      %c0_14 = arith.constant 0 : index
      %c0_15 = arith.constant 0 : index
      %21 = vector.load %arg7[%c0_14, %c0_15] : memref<1x128xf32, #tpu.memory_space<vmem>>, vector<1x128xf32>
      %cst_16 = arith.constant 1.000000e-24 : f32
      %22 = vector.broadcast %cst_16 : f32 to vector<1x128xf32>
      %23 = arith.maximumf %21, %22 : vector<1x128xf32>
      %24 = math.rsqrt %23 : vector<1x128xf32>
      %c0_17 = arith.constant 0 : index
      %c0_18 = arith.constant 0 : index
      %25 = vector.load %arg6[%c0_17, %c0_18] : memref<8x128xf32, #tpu.memory_space<vmem>>, vector<8x128xf32>
      %26 = vector.broadcast %24 : vector<1x128xf32> to vector<8x128xf32>
      %27 = arith.mulf %25, %26 : vector<8x128xf32>
      %c0_19 = arith.constant 0 : index
      %c0_20 = arith.constant 0 : index
      %28 = memref.load %arg2[%c0_19, %c0_20] : memref<1x1xf32, #tpu.memory_space<smem>>
      %c0_21 = arith.constant 0 : index
      %c0_22 = arith.constant 0 : index
      %29 = vector.load %arg5[%c0_21, %c0_22] : memref<1x128xf32, #tpu.memory_space<vmem>>, vector<1x128xf32>
      %30 = math.tanh %29 : vector<1x128xf32>
      %31 = vector.broadcast %28 : f32 to vector<1x128xf32>
      %32 = arith.mulf %31, %30 : vector<1x128xf32>
      %33 = vector.broadcast %32 : vector<1x128xf32> to vector<8x128xf32>
      %34 = arith.addf %27, %33 : vector<8x128xf32>
      %c0_23 = arith.constant 0 : index
      %c0_24 = arith.constant 0 : index
      %35 = vector.load %arg6[%c0_23, %c0_24] : memref<8x128xf32, #tpu.memory_space<vmem>>, vector<8x128xf32>
      tpu.vector_store %arg6[%c0_23, %c0_24], %34 {strides = array<i32>} : memref<8x128xf32, #tpu.memory_space<vmem>>, vector<8x128xf32>,
    } else {
    }
    return
  }
  func.func @transform_0(%arg0: i32, %arg1: i32) -> (i32, i32) {
    %c0_i32 = arith.constant 0 : i32
    %c0_i32_0 = arith.constant 0 : i32
    %c0_i32_1 = arith.constant 0 : i32
    return %c0_i32, %c0_i32_0 : i32, i32
  }
  func.func @transform_1(%arg0: i32, %arg1: i32) -> (i32, i32) {
    %c0_i32 = arith.constant 0 : i32
    %c0_i32_0 = arith.constant 0 : i32
    %c0_i32_1 = arith.constant 0 : i32
    return %c0_i32, %c0_i32_0 : i32, i32
  }
  func.func @transform_2(%arg0: i32, %arg1: i32) -> (i32, i32) {
    %c0_i32 = arith.constant 0 : i32
    return %arg1, %arg0 : i32, i32
  }
  func.func @transform_3(%arg0: i32, %arg1: i32) -> (i32, i32) {
    %c0_i32 = arith.constant 0 : i32
    %c0_i32_0 = arith.constant 0 : i32
    return %c0_i32, %arg0 : i32, i32
  }
  func.func @transform_4(%arg0: i32, %arg1: i32) -> (i32, i32) {
    %c0_i32 = arith.constant 0 : i32
    %c0_i32_0 = arith.constant 0 : i32
    return %c0_i32, %arg0 : i32, i32
  }
}

</mosaic_0001>

<llo_original>
// kernel: tpu_custom_call.1
$region0: #{tpu_custom_call.1}
  #allocation0 [shape = 'u32[]', space=smem, size = 0x4, offset = 0x4, fixed_abs, tag = 'smem constant byte address 0x4 - core index']
  #allocation1 [shape = 'u32[72,128]{1,0:T(1,128)}', space=vmem, size = 0x9000, scoped, tag = 'internal scratch']
  #allocation2 [shape = 'f32[1,128]{1,0:T(1,128)}', space=vmem, size = 0x200, scoped, tag = 'scratch operand']
  #allocation3 [shape = 'f32[1,1]{1,0:T(1,128)S(6)}', space=smem, size = 0x200, scoped, tag = 'scoped memory for tpu_custom_call.1']
  %s0 = inlined_call_operand.<no memory space> [shape: f32[1,1], index: 0, kind: input, shape index: {}]
  %s1 = inlined_call_operand.hbm [shape: f32[8,128], index: 1, kind: input, shape index: {}]
  %s2 = inlined_call_operand.hbm [shape: f32[128,128], index: 2, kind: input, shape index: {}]
  %s3 = inlined_call_operand.vmem [shape: f32[1,128], index: 3, kind: input, shape index: {}]
  %s4 = inlined_call_operand.hbm [shape: f32[8,128], index: 4, kind: output, shape index: {}]
  %s5 = sld [smem:[#allocation0]]
  $region42: #{tpu_custom_call.1} parent=0
    _
  %s7 = ssub.s32 1, %s5
  %s8 = scalar_select 0, %s7, %s5
  %9 = sst [smem:[#allocation3]] %s0
  $region1: #{tpu_custom_call.1} parent=0
    #allocation4 [shape = 'u8[4096]{0}', space=vmem, size = 0x1000, scoped, tag = 'input window, operand 1, single buffered']
    #allocation5 [shape = 's32[1]{0}', space=sflag, size = 0x4, scoped, tag = 'scoped memory for tpu_custom_call.1']
    #allocation6 [shape = 's32[1]{0}', space=sflag, size = 0x4, scoped, tag = 'scoped memory for tpu_custom_call.1']
    #allocation7 [shape = 'u8[65536]{0}', space=vmem, size = 0x10000, scoped, tag = 'input window, operand 2, single buffered']
    #allocation8 [shape = 's32[1]{0}', space=sflag, size = 0x4, scoped, tag = 'scoped memory for tpu_custom_call.1']
    #allocation9 [shape = 'u8[4096]{0}', space=vmem, size = 0x1000, scoped, tag = 'output window, operand 0, single buffered']
    %10 = vsyncpa [#allocation5], 0
    %11 = vsyncpa [#allocation8], 0
    %12 = vsyncpa [#allocation6], 0
    // Predicated region
    $region2: #{tpu_custom_call.1} parent=1 // pred_check
      _
    $region3: #{tpu_custom_call.1} parent=1 // pred_check_branch
      %14 = sbr.rel (0) target = $region5
    $region4: #{tpu_custom_call.1} parent=1 // pred_region
      _
    $region5: #{tpu_custom_call.1} parent=1 // pred_fallthru
      _
    // Predicated region
    $region6: #{tpu_custom_call.1} parent=1 // pred_check
      _
    $region7: #{tpu_custom_call.1} parent=1 // pred_check_branch
      %16 = sbr.rel (0) target = $region9
    $region8: #{tpu_custom_call.1} parent=1 // pred_region
      %18 = vsyncadd [#allocation5], 0
      %s20 = sshll.u32 %s1, 4
      %s21 = int_to_ptr.hbm [resolvable:$true] %s20
      %s22 = sshll.u32 [#allocation4], 4
      %s23 = int_to_ptr.vmem [resolvable:$true] %s22
      %25 = dma.hbm_to_vmem [thread:$0]  %s21, 128, %s23, [#allocation5]
    $region9: #{tpu_custom_call.1} parent=1 // pred_fallthru
      _
    // Predicated region
    $region10: #{tpu_custom_call.1} parent=1 // pred_check
      _
    $region11: #{tpu_custom_call.1} parent=1 // pred_check_branch
      %27 = sbr.rel (0) target = $region13
    $region12: #{tpu_custom_call.1} parent=1 // pred_region
      %29 = vsyncadd [#allocation8], 0
      %s30 = sshll.u32 %s2, 4
      %s31 = int_to_ptr.hbm [resolvable:$true] %s30
      %s32 = sshll.u32 [#allocation7], 4
      %s33 = int_to_ptr.vmem [resolvable:$true] %s32
      %38 = dma.hbm_to_vmem [thread:$0]  %s31, 2048, %s33, [#allocation8], 128, 128, 8
    $region13: #{tpu_custom_call.1} parent=1 // pred_fallthru
      _
    // Predicated region
    $region14: #{tpu_custom_call.1} parent=1 // pred_check
      _
    $region15: #{tpu_custom_call.1} parent=1 // pred_check_branch
      %40 = sbr.rel (0) target = $region17
    $region16: #{tpu_custom_call.1} parent=1 // pred_region
      _
    $region17: #{tpu_custom_call.1} parent=1 // pred_fallthru
      _
    // Predicated region
    $region18: #{tpu_custom_call.1} parent=1 // pred_check
      _
    $region19: #{tpu_custom_call.1} parent=1 // pred_check_branch
      %42 = sbr.rel (0) target = $region21
    $region20: #{tpu_custom_call.1} parent=1 // pred_region
      %44 = dma.done [#allocation5], 128
    $region21: #{tpu_custom_call.1} parent=1 // pred_fallthru
      _
    // Predicated region
    $region22: #{tpu_custom_call.1} parent=1 // pred_check
      _
    $region23: #{tpu_custom_call.1} parent=1 // pred_check_branch
      %46 = sbr.rel (0) target = $region25
    $region24: #{tpu_custom_call.1} parent=1 // pred_region
      %48 = dma.done [#allocation8], 2048
    $region25: #{tpu_custom_call.1} parent=1 // pred_fallthru
      _
    %p49 = scmp.eq.s32.totalorder 0, 0
    // Predicated region
    $region26: #{tpu_custom_call.1} parent=1 // pred_check
      %p50 = pneg %p49
    $region27: #{tpu_custom_call.1} parent=1 // pred_check_branch
      %52 = sbr.rel (%p50) target = $region29
    $region28: #{tpu_custom_call.1} parent=1 // pred_region
      %53 = vst [vmem:[#allocation9] sm:$0xff] 0.0
      %54 = vst [vmem:[#allocation2] sm:$0x1] 0.0
    $region29: #{tpu_custom_call.1} parent=1 // pred_fallthru
      _
    %s55 = smul.u32 0, 128
    %s56 = sshra.s32 %s55, 7
    %s57 = sand.u32 %s55, 127
    %s58 = scalar_lea.vmem [#allocation4], %s56
    %v59 = vld [vmem:[%s58] sm:$0xff]
    %v60 = vld [vmem:[#allocation7] sm:$0xff]
    %v61 = vld [vmem:[#allocation7 + $0x8] sm:$0xff]
    %v62 = vld [vmem:[#allocation7 + $0x10] sm:$0xff]
    %v63 = vld [vmem:[#allocation7 + $0x18] sm:$0xff]
    %v64 = vld [vmem:[#allocation7 + $0x20] sm:$0xff]
    %v65 = vld [vmem:[#allocation7 + $0x28] sm:$0xff]
    %v66 = vld [vmem:[#allocation7 + $0x30] sm:$0xff]
    %v67 = vld [vmem:[#allocation7 + $0x38] sm:$0xff]
    %v68 = vld [vmem:[#allocation7 + $0x40] sm:$0xff]
    %v69 = vld [vmem:[#allocation7 + $0x48] sm:$0xff]
    %v70 = vld [vmem:[#allocation7 + $0x50] sm:$0xff]
    %v71 = vld [vmem:[#allocation7 + $0x58] sm:$0xff]
    %v72 = vld [vmem:[#allocation7 + $0x60] sm:$0xff]
    %v73 = vld [vmem:[#allocation7 + $0x68] sm:$0xff]
    %v74 = vld [vmem:[#allocation7 + $0x70] sm:$0xff]
    %v75 = vld [vmem:[#allocation7 + $0x78] sm:$0xff]
    %v76 = vld [vmem:[#allocation9] sm:$0xff]
    %77 = vmatpush.msra.mxu0 %v75
    %78 = vmatpush.msra.mxu0 %v74
    %79 = vmatpush.msra.mxu0 %v73
    %80 = vmatpush.msra.mxu0 %v72
    %81 = vmatpush.msra.mxu0 %v71
    %82 = vmatpush.msra.mxu0 %v70
    %83 = vmatpush.msra.mxu0 %v69
    %84 = vmatpush.msra.mxu0 %v68
    %85 = vmatpush.msra.mxu0 %v67
    %86 = vmatpush.msra.mxu0 %v66
    %87 = vmatpush.msra.mxu0 %v65
    %88 = vmatpush.msra.mxu0 %v64
    %89 = vmatpush.msra.mxu0 %v63
    %90 = vmatpush.msra.mxu0 %v62
    %91 = vmatpush.msra.mxu0 %v61
    %92 = vmatpush.msra.mxu0 %v60
    %93 = vmatmul.f32.gmra.mxu0 %v59
    %v94 = vpop.f32.mrf.mxu0
    %v95 = vadd.f32 0.0, %v94
    %96 = vdwg.mxu0
    %v97 = vadd.f32 %v76, %v95
    %98 = vst [vmem:[#allocation9] sm:$0xff] %v97
    %v99 = vld [vmem:[#allocation2] sm:$0x1]
    %v100 = vmul.f32 %v60, %v60
    %v101 = vmul.f32 %v61, %v61
    %v102 = vmul.f32 %v62, %v62
    %v103 = vmul.f32 %v63, %v63
    %v104 = vmul.f32 %v64, %v64
    %v105 = vmul.f32 %v65, %v65
    %v106 = vmul.f32 %v66, %v66
    %v107 = vmul.f32 %v67, %v67
    %v108 = vmul.f32 %v68, %v68
    %v109 = vmul.f32 %v69, %v69
    %v110 = vmul.f32 %v70, %v70
    %v111 = vmul.f32 %v71, %v71
    %v112 = vmul.f32 %v72, %v72
    %v113 = vmul.f32 %v73, %v73
    %v114 = vmul.f32 %v74, %v74
    %v115 = vmul.f32 %v75, %v75
    %v116 = vadd.f32 %v100, %v101
    %v117 = vadd.f32 %v116, %v102
    %v118 = vadd.f32 %v117, %v103
    %v119 = vadd.f32 %v118, %v104
    %v120 = vadd.f32 %v119, %v105
    %v121 = vadd.f32 %v120, %v106
    %v122 = vadd.f32 %v121, %v107
    %v123 = vadd.f32 %v122, %v108
    %v124 = vadd.f32 %v123, %v109
    %v125 = vadd.f32 %v124, %v110
    %v126 = vadd.f32 %v125, %v111
    %v127 = vadd.f32 %v126, %v112
    %v128 = vadd.f32 %v127, %v113
    %v129 = vadd.f32 %v128, %v114
    %v130 = vadd.f32 %v129, %v115
    %v131 = vrot.slane %v130, 4
    %v132 = vadd.f32 %v130, %v131
    %v133 = vrot.slane %v132, 2
    %v134 = vadd.f32 %v132, %v133
    %v135 = vrot.slane %v134, 1
    %v136 = vadd.f32 %v134, %v135
    %v137 = vadd.f32 %v99, %v136
    %138 = vst [vmem:[#allocation2] sm:$0x1] %v137
    // Predicated region
    $region30: #{tpu_custom_call.1} parent=1 // pred_check
      %p139 = pneg %p49
    $region31: #{tpu_custom_call.1} parent=1 // pred_check_branch
      %141 = sbr.rel (%p139) target = $region33
    $region32: #{tpu_custom_call.1} parent=1 // pred_region
      %v142 = vld [vmem:[#allocation2] sm:$0x1]
      %v143 = vmax.f32 %v142, 1e-24
      %v144 = vrsqrt.pop %v143
      %v145 = vmul.f32 %v144, %v143
      %v146 = vmul.f32 %v145, %v144
      %v147 = vmul.f32 0.5, %v146
      %v148 = vsub.f32 1.5, %v147
      %v149 = vmul.f32 %v144, %v148
      %vm150 = vweird.f32 %v143
      %vm151 = vweird.f32 %v144
      %vm152 = vmor %vm150, %vm151
      %v153 = vsel %vm152, %v144, %v149
      %v154 = vld [vmem:[#allocation9] sm:$0xff]
      %v156 = vperm.slane %v153, 0
      %v158 = vmul.f32 %v154, %v156
      %s159 = sld [smem:[#allocation3]]
      %v160 = vld [vmem:[%s3] sm:$0x1]
      %v161 = vtanh.pop %v160
      %v162 = vstv %s159
      %v163 = vmul.f32 %v162, %v161
      %v165 = vperm.slane %v163, 0
      %v167 = vadd.f32 %v158, %v165
      %168 = vst [vmem:[#allocation9] sm:$0xff] %v167
    $region33: #{tpu_custom_call.1} parent=1 // pred_fallthru
      _
    // Predicated region
    $region34: #{tpu_custom_call.1} parent=1 // pred_check
      _
    $region35: #{tpu_custom_call.1} parent=1 // pred_check_branch
      %170 = sbr.rel (0) target = $region37
    $region36: #{tpu_custom_call.1} parent=1 // pred_region
      %172 = vsyncadd [#allocation6], 0
      %s174 = sshll.u32 [#allocation9], 4
      %s175 = int_to_ptr.vmem [resolvable:$true] %s174
      %s176 = sshll.u32 %s4, 4
      %s177 = int_to_ptr.hbm [resolvable:$true] %s176
      %179 = dma.vmem_to_hbm [thread:$0]  %s175, 128, %s177, [#allocation6]
    $region37: #{tpu_custom_call.1} parent=1 // pred_fallthru
      _
    // Predicated region
    $region38: #{tpu_custom_call.1} parent=1 // pred_check
      _
    $region39: #{tpu_custom_call.1} parent=1 // pred_check_branch
      %181 = sbr.rel (0) target = $region41
    $region40: #{tpu_custom_call.1} parent=1 // pred_region
      %183 = dma.done [#allocation6], 128
    $region41: #{tpu_custom_call.1} parent=1 // pred_fallthru
      _
    %184 = vsyncpa [#allocation5], 1
    %185 = vsyncpa [#allocation8], 1
    %186 = vsyncpa [#allocation6], 1

</llo_original>
